<compile_context>
chip_gen: v5e
topology: v5e:2x2
jax: 0.10.0
libtpu: 0.0.40
codegen_flags: <defaults>
</compile_context>

<pallas_src>
import jax
import jax.numpy as jnp
from jax.experimental import pallas as pl
from jax.experimental.pallas import tpu as pltpu


_LANE = 128
# Candidate slab widths (lane dim), widest first: wide, unmasked vst streams
# are the biggest single measured lever for HBM-bound elementwise kernels.
_WIDTH_CANDIDATES = (8192, 4096, 2048, 1024, 512, 256, 128)
# ~4 MiB per block amortizes the ~0.35 us/grid-step overhead; with
# double-buffered input + output that is 4 x 4 MiB = 16 MiB of VMEM, safely
# under the 32 MiB scoped limit on v6e/v7x (v5e needs the explicit bump below).
_TARGET_TILE_BYTES = 4 * 1024 * 1024
_VMEM_LIMIT_BYTES = 32 * 1024 * 1024


def _swish_kernel(x_ref, o_ref):
    xf = x_ref[...].astype(jnp.float32)
    # sigmoid(x) = 0.5 * (1 + tanh(x / 2)): one EUP transcendental per vreg
    # instead of exp + reciprocal (defensive margin on v7x's faster HBM).
    sig = 0.5 * (1.0 + jnp.tanh(0.5 * xf))
    o_ref[...] = (xf * sig).astype(o_ref.dtype)


def swish(x):
    """Elementwise Swish (x * sigmoid(x)) on an arbitrary-shaped array."""
    orig_shape = x.shape
    orig_dtype = x.dtype
    n = x.size
    itemsize = jnp.dtype(orig_dtype).itemsize

    flat = x.reshape(-1)

    # Pad only up to a multiple of 128 lanes, and only when actually needed —
    # padding + a trailing slice each cost a full extra HBM pass in XLA.
    n128 = pl.cdiv(n, _LANE) * _LANE
    if n128 != n:
        flat = jnp.pad(flat, (0, n128 - n))

    # Widest lane dimension that evenly divides the (128-aligned) length.
    width = _LANE
    for cand in _WIDTH_CANDIDATES:
        if n128 % cand == 0:
            width = cand
            break
    rows = n128 // width
    x2d = flat.reshape(rows, width)

    # Block rows sized so each tile is ~_TARGET_TILE_BYTES. Keep the sublane
    # count a multiple of 32 (covers f32/bf16/int8 sublane tiling) unless the
    # block spans the full row extent (which is always legal).
    max_block_rows = max(1, _TARGET_TILE_BYTES // (width * itemsize))
    if rows <= max_block_rows:
        block_rows = rows
    else:
        block_rows = max(32, (max_block_rows // 32) * 32)

    grid = (pl.cdiv(rows, block_rows),)  # ragged tail handled by masked writes

    out2d = pl.pallas_call(
        _swish_kernel,
        out_shape=jax.ShapeDtypeStruct((rows, width), orig_dtype),
        grid_spec=pltpu.PrefetchScalarGridSpec(
            num_scalar_prefetch=0,
            grid=grid,
            in_specs=[pl.BlockSpec((block_rows, width), lambda i: (i, 0))],
            out_specs=pl.BlockSpec((block_rows, width), lambda i: (i, 0)),
        ),
        compiler_params=pltpu.CompilerParams(
            dimension_semantics=("parallel",),   # shards grid across v7x's 2 TCs
            vmem_limit_bytes=_VMEM_LIMIT_BYTES,
        ),
    )(x2d)

    out_flat = out2d.reshape(-1)
    if n128 != n:
        out_flat = out_flat[:n]
    return out_flat.reshape(orig_shape)


if __name__ == "__main__":
    key = jax.random.PRNGKey(0)
    # NCHW input, matching PyTorch conv convention: batch=2, channels=4, 16x16.
    x = jax.random.normal(key, (2, 4, 16, 16), dtype=jnp.float32)

    y = swish(x)
    jax.block_until_ready(y)

    # Sanity check against pure-JAX reference.
    y_ref = x * jax.nn.sigmoid(x)
    assert y.shape == x.shape and y.dtype == x.dtype
    assert jnp.allclose(y, y_ref, atol=1e-5, rtol=1e-5)

    print("KERNEL_OK")
</pallas_src>

<mosaic_0001>
module attributes {stable_mosaic.version = 11 : i64} {
  func.func @_swish_kernel(%arg0: i32, %arg1: memref<1x2048xf32, #tpu.memory_space<vmem>>, %arg2: memref<1x2048xf32, #tpu.memory_space<vmem>>) attributes {dimension_semantics = [#tpu.dimension_semantics<parallel>], iteration_bounds = array<i64: 1>, scalar_prefetch = 0 : i64, scratch_operands = 0 : i64, tpu.core_type = #tpu.core_type<tc>, window_params = [{transform_indices = @transform_0, window_bounds = array<i64: 1, 2048>}, {transform_indices = @transform_1, window_bounds = array<i64: 1, 2048>}]} {
    %c0 = arith.constant 0 : index
    %c0_0 = arith.constant 0 : index
    %0 = vector.load %arg1[%c0, %c0_0] : memref<1x2048xf32, #tpu.memory_space<vmem>>, vector<1x2048xf32>
    %cst = arith.constant 5.000000e-01 : f32
    %1 = vector.broadcast %cst : f32 to vector<1x2048xf32>
    %2 = arith.mulf %1, %0 : vector<1x2048xf32>
    %3 = math.tanh %2 : vector<1x2048xf32>
    %cst_1 = arith.constant 1.000000e+00 : f32
    %4 = vector.broadcast %cst_1 : f32 to vector<1x2048xf32>
    %5 = arith.addf %4, %3 : vector<1x2048xf32>
    %cst_2 = arith.constant 5.000000e-01 : f32
    %6 = vector.broadcast %cst_2 : f32 to vector<1x2048xf32>
    %7 = arith.mulf %6, %5 : vector<1x2048xf32>
    %8 = arith.mulf %0, %7 : vector<1x2048xf32>
    %c0_3 = arith.constant 0 : index
    %c0_4 = arith.constant 0 : index
    %9 = vector.load %arg2[%c0_3, %c0_4] : memref<1x2048xf32, #tpu.memory_space<vmem>>, vector<1x2048xf32>
    tpu.vector_store %arg2[%c0_3, %c0_4], %8 {strides = array<i32>} : memref<1x2048xf32, #tpu.memory_space<vmem>>, vector<1x2048xf32>,
    return
  }
  func.func @transform_0(%arg0: i32) -> (i32, i32) {
    %c0_i32 = arith.constant 0 : i32
    %c0_i32_0 = arith.constant 0 : i32
    return %arg0, %c0_i32 : i32, i32
  }
  func.func @transform_1(%arg0: i32) -> (i32, i32) {
    %c0_i32 = arith.constant 0 : i32
    %c0_i32_0 = arith.constant 0 : i32
    return %arg0, %c0_i32 : i32, i32
  }
}

</mosaic_0001>

<llo_original>
// kernel: tpu_custom_call.1
$region0: #{tpu_custom_call.1}
  #allocation0 [shape = 'u32[]', space=smem, size = 0x4, offset = 0x4, fixed_abs, tag = 'smem constant byte address 0x4 - core index']
  #allocation1 [shape = 'u32[72,128]{1,0:T(1,128)}', space=vmem, size = 0x9000, scoped, tag = 'internal scratch']
  %s0 = inlined_call_operand.hbm [shape: f32[1,2048], index: 0, kind: input, shape index: {}]
  %s1 = inlined_call_operand.hbm [shape: f32[1,2048], index: 1, kind: output, shape index: {}]
  %s2 = sld [smem:[#allocation0]]
  $region18: #{tpu_custom_call.1} parent=0
    _
  %s4 = ssub.s32 1, %s2
  %s5 = scalar_select 0, %s4, %s2
  $region1: #{tpu_custom_call.1} parent=0
    #allocation2 [shape = 'u8[8192]{0}', space=vmem, size = 0x2000, scoped, tag = 'input window, operand 0, single buffered']
    #allocation3 [shape = 's32[1]{0}', space=sflag, size = 0x4, scoped, tag = 'scoped memory for tpu_custom_call.1']
    #allocation4 [shape = 's32[1]{0}', space=sflag, size = 0x4, scoped, tag = 'scoped memory for tpu_custom_call.1']
    #allocation5 [shape = 'u8[8192]{0}', space=vmem, size = 0x2000, scoped, tag = 'output window, operand 0, single buffered']
    %6 = vsyncpa [#allocation3], 0
    %7 = vsyncpa [#allocation4], 0
    // Predicated region
    $region2: #{tpu_custom_call.1} parent=1 // pred_check
      _
    $region3: #{tpu_custom_call.1} parent=1 // pred_check_branch
      %9 = sbr.rel (0) target = $region5
    $region4: #{tpu_custom_call.1} parent=1 // pred_region
      %11 = vsyncadd [#allocation3], 0
      %s13 = sshll.u32 %s0, 4
      %s14 = int_to_ptr.hbm [resolvable:$true] %s13
      %s15 = sshll.u32 [#allocation2], 4
      %s16 = int_to_ptr.vmem [resolvable:$true] %s15
      %18 = dma.hbm_to_vmem [thread:$0]  %s14, 256, %s16, [#allocation3]
    $region5: #{tpu_custom_call.1} parent=1 // pred_fallthru
      _
    // Predicated region
    $region6: #{tpu_custom_call.1} parent=1 // pred_check
      _
    $region7: #{tpu_custom_call.1} parent=1 // pred_check_branch
      %20 = sbr.rel (0) target = $region9
    $region8: #{tpu_custom_call.1} parent=1 // pred_region
      %22 = dma.done [#allocation3], 256
    $region9: #{tpu_custom_call.1} parent=1 // pred_fallthru
      _
    %v23 = vld [vmem:[#allocation2] sm:$0xff]
    %v24 = vld [vmem:[#allocation2 + $0x8] sm:$0xff]
    %v25 = vmul.f32 %v23, 0.5
    %v26 = vmul.f32 %v24, 0.5
    %v27 = vtanh.pop %v25
    %v28 = vtanh.pop %v26
    %v29 = vadd.f32 %v27, 1.0
    %v30 = vadd.f32 %v28, 1.0
    %v31 = vmul.f32 %v29, 0.5
    %v32 = vmul.f32 %v30, 0.5
    %v33 = vmul.f32 %v23, %v31
    %v34 = vmul.f32 %v24, %v32
    %35 = vst [vmem:[#allocation5] sm:$0xff] %v33
    %36 = vst [vmem:[#allocation5 + $0x8] sm:$0xff] %v34
    // Predicated region
    $region10: #{tpu_custom_call.1} parent=1 // pred_check
      _
    $region11: #{tpu_custom_call.1} parent=1 // pred_check_branch
      %38 = sbr.rel (0) target = $region13
    $region12: #{tpu_custom_call.1} parent=1 // pred_region
      %40 = vsyncadd [#allocation4], 0
      %s42 = sshll.u32 [#allocation5], 4
      %s43 = int_to_ptr.vmem [resolvable:$true] %s42
      %s44 = sshll.u32 %s1, 4
      %s45 = int_to_ptr.hbm [resolvable:$true] %s44
      %47 = dma.vmem_to_hbm [thread:$0]  %s43, 256, %s45, [#allocation4]
    $region13: #{tpu_custom_call.1} parent=1 // pred_fallthru
      _
    // Predicated region
    $region14: #{tpu_custom_call.1} parent=1 // pred_check
      _
    $region15: #{tpu_custom_call.1} parent=1 // pred_check_branch
      %49 = sbr.rel (0) target = $region17
    $region16: #{tpu_custom_call.1} parent=1 // pred_region
      %51 = dma.done [#allocation4], 256
    $region17: #{tpu_custom_call.1} parent=1 // pred_fallthru
      _
    %52 = vsyncpa [#allocation3], 1
    %53 = vsyncpa [#allocation4], 1

</llo_original>
